<compile_context>
chip_gen: v7x
topology: tpu7x:2x2x1
jax: 0.10.0
libtpu: 0.0.40
codegen_flags: <defaults>
</compile_context>

<pallas_src>
import functools

import jax
import jax.numpy as jnp
from jax.experimental import pallas as pl
from jax.experimental.pallas import tpu as pltpu


def _round_up(n, m):
    return ((n + m - 1) // m) * m


def dynet_kernel(x_ref,
                 w1, b1, w2, b2, w3, b3, w4, b4, w5, b5, w6, b6, w7, b7,
                 o_ref):
    """Entire MLP hot path runs in VMEM on one batch tile.

    Weights are bf16 [in, out]; biases are f32 [1, out]. Matmuls run on the
    MXU with bf16 operands and f32 accumulation; bias add + ReLU run in f32 on
    the VPU. The output store is (bt, dim), i.e. exactly the useful bytes.
    """

    def layer(h, w_ref, b_ref, relu):
        y = jnp.dot(h.astype(jnp.bfloat16), w_ref[...],
                    preferred_element_type=jnp.float32) + b_ref[...]
        return jnp.maximum(y, 0.0) if relu else y

    h = x_ref[...]  # layer() casts to bf16; no separate f32 pass over the tile
    h = layer(h, w1, b1, True)
    h = layer(h, w2, b2, True)
    h = layer(h, w3, b3, True)
    h = layer(h, w4, b4, True)
    h = layer(h, w5, b5, True)
    h = layer(h, w6, b6, True)
    o_ref[...] = layer(h, w7, b7, False).astype(o_ref.dtype)


def prepare_params(params):
    """One-time param prep, done OUTSIDE the jitted hot path.

    Returns a flat list [w1, b1, ..., w7, b7] with bf16 weights of shape
    [in, out] (torch weight transposed) and f32 biases of shape [1, out].
    """
    kp = []
    for w, b in params:
        kp.append(jnp.asarray(w, jnp.bfloat16))
        kp.append(jnp.asarray(b, jnp.float32).reshape(1, -1))
    return kp


def dynet_forward(t, x, kernel_params, *, batch_tile=4096):
    """Pallas wrapper. `t` is ignored (matches the PyTorch forward).

    `kernel_params` is the flat list produced by `prepare_params`.
    """
    del t
    B, dim = x.shape

    # Effective batch tile: 8-aligned, no larger than the (8-rounded) batch.
    bt = min(_round_up(batch_tile, 8), _round_up(B, 8))
    # v7x has 2 TensorCores: give the "parallel" batch axis at least 2 grid
    # steps whenever the batch allows it, so a whole core is never idle.
    if B >= 16 and pl.cdiv(B, bt) < 2:
        bt = _round_up(pl.cdiv(B, 2), 8)

    # Ragged last tile is handled by Pallas: out-of-bounds output rows are
    # masked on store, so no wrapper-side pad of x / slice of the result.
    grid = (pl.cdiv(B, bt),)

    # Full-array blocks with constant index maps -> weights stay resident in
    # VMEM across the batch grid (no per-step re-DMA).
    weight_specs = [pl.BlockSpec(p.shape, lambda i: (0, 0))
                    for p in kernel_params]

    # VMEM budget: double-buffered in/out tiles + resident params + generous
    # headroom for the chained bt x (<=128) f32 activation temps.
    io_bytes = 2 * 2 * bt * dim * 4
    w_bytes = 2 * sum(int(p.size) * p.dtype.itemsize for p in kernel_params)
    act_bytes = bt * 512 * 4
    vmem_bytes = int(min(max(32 << 20, 2 * (io_bytes + w_bytes + act_bytes)),
                         56 << 20))

    return pl.pallas_call(
        dynet_kernel,
        out_shape=jax.ShapeDtypeStruct((B, dim), x.dtype),
        grid_spec=pltpu.PrefetchScalarGridSpec(
            num_scalar_prefetch=0,
            grid=grid,
            in_specs=[pl.BlockSpec((bt, dim), lambda i: (i, 0))]
            + weight_specs,
            out_specs=pl.BlockSpec((bt, dim), lambda i: (i, 0)),
        ),
        compiler_params=pltpu.CompilerParams(
            dimension_semantics=("parallel",),
            vmem_limit_bytes=vmem_bytes),
    )(x, *kernel_params)


def init_params(dim, key):
    """Deterministic synthetic init matching nn.Linear shapes.

    torch.nn.Linear(in, out) has weight [out, in]; we store the transpose
    [in, out] so the kernel can do x @ W. Biases are kept 2D (1, out).
    """
    widths = [dim, 16, 32, 64, 128, 64, 16, dim]
    params = []
    for fan_in, fan_out in zip(widths[:-1], widths[1:]):
        key, kw, kb = jax.random.split(key, 3)
        bound = 1.0 / jnp.sqrt(jnp.float32(fan_in))
        w = jax.random.uniform(kw, (fan_in, fan_out), jnp.float32,
                               minval=-bound, maxval=bound)
        b = jax.random.uniform(kb, (1, fan_out), jnp.float32,
                               minval=-bound, maxval=bound)
        params.append((w, b))
    return params


def reference_forward_f32(x, params):
    """Plain-JAX f32 reference (exact original semantics)."""
    h = x
    for i, (w, b) in enumerate(params):
        h = h @ w + b
        if i < len(params) - 1:
            h = jnp.maximum(h, 0.0)
    return h


def reference_forward_bf16(x, params):
    """Plain-JAX reference matching the kernel's bf16-operand / f32-acc math."""
    h = x
    for i, (w, b) in enumerate(params):
        h = jnp.dot(h.astype(jnp.bfloat16), w.astype(jnp.bfloat16),
                    preferred_element_type=jnp.float32) + b
        if i < len(params) - 1:
            h = jnp.maximum(h, 0.0)
    return h


if __name__ == "__main__":
    key = jax.random.PRNGKey(0)
    dim = 8
    batch = 24  # not a tile multiple -> exercises the ragged last block + 2-step grid

    k_x, k_p = jax.random.split(key)
    x = jax.random.normal(k_x, (batch, dim), dtype=jnp.float32)
    t = jnp.float32(0.0)  # unused, as in the PyTorch forward
    params = init_params(dim, k_p)

    # Param cast/reshape happens once here, outside the jitted hot path.
    kernel_params = prepare_params(params)

    fwd = jax.jit(functools.partial(dynet_forward, batch_tile=4096))
    out = jax.block_until_ready(fwd(t, x, kernel_params))
    assert out.shape == (batch, dim)

    # Tight check vs a reference that uses the same bf16-operand math.
    ref_bf16 = reference_forward_bf16(x, params)
    assert jnp.allclose(out, ref_bf16, atol=1e-3, rtol=1e-3), \
        "mismatch vs bf16-matched reference"

    # Loose check vs the exact f32 semantics of the original module.
    ref_f32 = reference_forward_f32(x, params)
    assert jnp.allclose(out, ref_f32, atol=5e-2, rtol=5e-2), \
        "mismatch vs f32 reference"

    print("KERNEL_OK")
</pallas_src>

<mosaic_0001>
module attributes {stable_mosaic.version = 11 : i64} {
  func.func @dynet_kernel(%arg0: i32, %arg1: memref<16x8xf32, #tpu.memory_space<vmem>>, %arg2: memref<8x16xbf16, #tpu.memory_space<vmem>>, %arg3: memref<1x16xf32, #tpu.memory_space<vmem>>, %arg4: memref<16x32xbf16, #tpu.memory_space<vmem>>, %arg5: memref<1x32xf32, #tpu.memory_space<vmem>>, %arg6: memref<32x64xbf16, #tpu.memory_space<vmem>>, %arg7: memref<1x64xf32, #tpu.memory_space<vmem>>, %arg8: memref<64x128xbf16, #tpu.memory_space<vmem>>, %arg9: memref<1x128xf32, #tpu.memory_space<vmem>>, %arg10: memref<128x64xbf16, #tpu.memory_space<vmem>>, %arg11: memref<1x64xf32, #tpu.memory_space<vmem>>, %arg12: memref<64x16xbf16, #tpu.memory_space<vmem>>, %arg13: memref<1x16xf32, #tpu.memory_space<vmem>>, %arg14: memref<16x8xbf16, #tpu.memory_space<vmem>>, %arg15: memref<1x8xf32, #tpu.memory_space<vmem>>, %arg16: memref<16x8xf32, #tpu.memory_space<vmem>>) attributes {dimension_semantics = [#tpu.dimension_semantics<parallel>], iteration_bounds = array<i64: 2>, scalar_prefetch = 0 : i64, scratch_operands = 0 : i64, tpu.core_type = #tpu.core_type<tc>, window_params = [{transform_indices = @transform_0, window_bounds = array<i64: 16, 8>}, {pipeline_mode = #tpu.pipeline_mode<synchronous>, transform_indices = @transform_1, window_bounds = array<i64: 8, 16>}, {pipeline_mode = #tpu.pipeline_mode<synchronous>, transform_indices = @transform_2, window_bounds = array<i64: 1, 16>}, {pipeline_mode = #tpu.pipeline_mode<synchronous>, transform_indices = @transform_3, window_bounds = array<i64: 16, 32>}, {pipeline_mode = #tpu.pipeline_mode<synchronous>, transform_indices = @transform_4, window_bounds = array<i64: 1, 32>}, {pipeline_mode = #tpu.pipeline_mode<synchronous>, transform_indices = @transform_5, window_bounds = array<i64: 32, 64>}, {pipeline_mode = #tpu.pipeline_mode<synchronous>, transform_indices = @transform_6, window_bounds = array<i64: 1, 64>}, {pipeline_mode = #tpu.pipeline_mode<synchronous>, transform_indices = @transform_7, window_bounds = array<i64: 64, 128>}, {pipeline_mode = #tpu.pipeline_mode<synchronous>, transform_indices = @transform_8, window_bounds = array<i64: 1, 128>}, {pipeline_mode = #tpu.pipeline_mode<synchronous>, transform_indices = @transform_9, window_bounds = array<i64: 128, 64>}, {pipeline_mode = #tpu.pipeline_mode<synchronous>, transform_indices = @transform_10, window_bounds = array<i64: 1, 64>}, {pipeline_mode = #tpu.pipeline_mode<synchronous>, transform_indices = @transform_11, window_bounds = array<i64: 64, 16>}, {pipeline_mode = #tpu.pipeline_mode<synchronous>, transform_indices = @transform_12, window_bounds = array<i64: 1, 16>}, {pipeline_mode = #tpu.pipeline_mode<synchronous>, transform_indices = @transform_13, window_bounds = array<i64: 16, 8>}, {pipeline_mode = #tpu.pipeline_mode<synchronous>, transform_indices = @transform_14, window_bounds = array<i64: 1, 8>}, {transform_indices = @transform_15, window_bounds = array<i64: 16, 8>}]} {
    %c0 = arith.constant 0 : index
    %c0_0 = arith.constant 0 : index
    %0 = vector.load %arg1[%c0, %c0_0] : memref<16x8xf32, #tpu.memory_space<vmem>>, vector<16x8xf32>
    %1 = arith.truncf %0 : vector<16x8xf32> to vector<16x8xbf16>
    %c0_1 = arith.constant 0 : index
    %c0_2 = arith.constant 0 : index
    %2 = vector.load %arg2[%c0_1, %c0_2] : memref<8x16xbf16, #tpu.memory_space<vmem>>, vector<8x16xbf16>
    %cst = arith.constant dense<0.000000e+00> : vector<16x16xf32>
    %3 = tpu.matmul %1, %2, %cst {dimension_numbers = #tpu.dot_dimension_numbers<[1], [0], [0], [1], [0, 0, 1, 1], [], []>} : vector<16x8xbf16>, vector<8x16xbf16>, vector<16x16xf32> -> vector<16x16xf32>
    %c0_3 = arith.constant 0 : index
    %c0_4 = arith.constant 0 : index
    %4 = vector.load %arg3[%c0_3, %c0_4] : memref<1x16xf32, #tpu.memory_space<vmem>>, vector<1x16xf32>
    %5 = vector.broadcast %4 : vector<1x16xf32> to vector<16x16xf32>
    %6 = arith.addf %3, %5 : vector<16x16xf32>
    %cst_5 = arith.constant 0.000000e+00 : f32
    %7 = vector.broadcast %cst_5 : f32 to vector<16x16xf32>
    %8 = arith.maximumf %6, %7 : vector<16x16xf32>
    %9 = arith.truncf %8 : vector<16x16xf32> to vector<16x16xbf16>
    %c0_6 = arith.constant 0 : index
    %c0_7 = arith.constant 0 : index
    %10 = vector.load %arg4[%c0_6, %c0_7] : memref<16x32xbf16, #tpu.memory_space<vmem>>, vector<16x32xbf16>
    %cst_8 = arith.constant dense<0.000000e+00> : vector<16x32xf32>
    %11 = tpu.matmul %9, %10, %cst_8 {dimension_numbers = #tpu.dot_dimension_numbers<[1], [0], [0], [1], [0, 0, 1, 1], [], []>} : vector<16x16xbf16>, vector<16x32xbf16>, vector<16x32xf32> -> vector<16x32xf32>
    %c0_9 = arith.constant 0 : index
    %c0_10 = arith.constant 0 : index
    %12 = vector.load %arg5[%c0_9, %c0_10] : memref<1x32xf32, #tpu.memory_space<vmem>>, vector<1x32xf32>
    %13 = vector.broadcast %12 : vector<1x32xf32> to vector<16x32xf32>
    %14 = arith.addf %11, %13 : vector<16x32xf32>
    %cst_11 = arith.constant 0.000000e+00 : f32
    %15 = vector.broadcast %cst_11 : f32 to vector<16x32xf32>
    %16 = arith.maximumf %14, %15 : vector<16x32xf32>
    %17 = arith.truncf %16 : vector<16x32xf32> to vector<16x32xbf16>
    %c0_12 = arith.constant 0 : index
    %c0_13 = arith.constant 0 : index
    %18 = vector.load %arg6[%c0_12, %c0_13] : memref<32x64xbf16, #tpu.memory_space<vmem>>, vector<32x64xbf16>
    %cst_14 = arith.constant dense<0.000000e+00> : vector<16x64xf32>
    %19 = tpu.matmul %17, %18, %cst_14 {dimension_numbers = #tpu.dot_dimension_numbers<[1], [0], [0], [1], [0, 0, 1, 1], [], []>} : vector<16x32xbf16>, vector<32x64xbf16>, vector<16x64xf32> -> vector<16x64xf32>
    %c0_15 = arith.constant 0 : index
    %c0_16 = arith.constant 0 : index
    %20 = vector.load %arg7[%c0_15, %c0_16] : memref<1x64xf32, #tpu.memory_space<vmem>>, vector<1x64xf32>
    %21 = vector.broadcast %20 : vector<1x64xf32> to vector<16x64xf32>
    %22 = arith.addf %19, %21 : vector<16x64xf32>
    %cst_17 = arith.constant 0.000000e+00 : f32
    %23 = vector.broadcast %cst_17 : f32 to vector<16x64xf32>
    %24 = arith.maximumf %22, %23 : vector<16x64xf32>
    %25 = arith.truncf %24 : vector<16x64xf32> to vector<16x64xbf16>
    %c0_18 = arith.constant 0 : index
    %c0_19 = arith.constant 0 : index
    %26 = vector.load %arg8[%c0_18, %c0_19] : memref<64x128xbf16, #tpu.memory_space<vmem>>, vector<64x128xbf16>
    %cst_20 = arith.constant dense<0.000000e+00> : vector<16x128xf32>
    %27 = tpu.matmul %25, %26, %cst_20 {dimension_numbers = #tpu.dot_dimension_numbers<[1], [0], [0], [1], [0, 0, 1, 1], [], []>} : vector<16x64xbf16>, vector<64x128xbf16>, vector<16x128xf32> -> vector<16x128xf32>
    %c0_21 = arith.constant 0 : index
    %c0_22 = arith.constant 0 : index
    %28 = vector.load %arg9[%c0_21, %c0_22] : memref<1x128xf32, #tpu.memory_space<vmem>>, vector<1x128xf32>
    %29 = vector.broadcast %28 : vector<1x128xf32> to vector<16x128xf32>
    %30 = arith.addf %27, %29 : vector<16x128xf32>
    %cst_23 = arith.constant 0.000000e+00 : f32
    %31 = vector.broadcast %cst_23 : f32 to vector<16x128xf32>
    %32 = arith.maximumf %30, %31 : vector<16x128xf32>
    %33 = arith.truncf %32 : vector<16x128xf32> to vector<16x128xbf16>
    %c0_24 = arith.constant 0 : index
    %c0_25 = arith.constant 0 : index
    %34 = vector.load %arg10[%c0_24, %c0_25] : memref<128x64xbf16, #tpu.memory_space<vmem>>, vector<128x64xbf16>
    %cst_26 = arith.constant dense<0.000000e+00> : vector<16x64xf32>
    %35 = tpu.matmul %33, %34, %cst_26 {dimension_numbers = #tpu.dot_dimension_numbers<[1], [0], [0], [1], [0, 0, 1, 1], [], []>} : vector<16x128xbf16>, vector<128x64xbf16>, vector<16x64xf32> -> vector<16x64xf32>
    %c0_27 = arith.constant 0 : index
    %c0_28 = arith.constant 0 : index
    %36 = vector.load %arg11[%c0_27, %c0_28] : memref<1x64xf32, #tpu.memory_space<vmem>>, vector<1x64xf32>
    %37 = vector.broadcast %36 : vector<1x64xf32> to vector<16x64xf32>
    %38 = arith.addf %35, %37 : vector<16x64xf32>
    %cst_29 = arith.constant 0.000000e+00 : f32
    %39 = vector.broadcast %cst_29 : f32 to vector<16x64xf32>
    %40 = arith.maximumf %38, %39 : vector<16x64xf32>
    %41 = arith.truncf %40 : vector<16x64xf32> to vector<16x64xbf16>
    %c0_30 = arith.constant 0 : index
    %c0_31 = arith.constant 0 : index
    %42 = vector.load %arg12[%c0_30, %c0_31] : memref<64x16xbf16, #tpu.memory_space<vmem>>, vector<64x16xbf16>
    %cst_32 = arith.constant dense<0.000000e+00> : vector<16x16xf32>
    %43 = tpu.matmul %41, %42, %cst_32 {dimension_numbers = #tpu.dot_dimension_numbers<[1], [0], [0], [1], [0, 0, 1, 1], [], []>} : vector<16x64xbf16>, vector<64x16xbf16>, vector<16x16xf32> -> vector<16x16xf32>
    %c0_33 = arith.constant 0 : index
    %c0_34 = arith.constant 0 : index
    %44 = vector.load %arg13[%c0_33, %c0_34] : memref<1x16xf32, #tpu.memory_space<vmem>>, vector<1x16xf32>
    %45 = vector.broadcast %44 : vector<1x16xf32> to vector<16x16xf32>
    %46 = arith.addf %43, %45 : vector<16x16xf32>
    %cst_35 = arith.constant 0.000000e+00 : f32
    %47 = vector.broadcast %cst_35 : f32 to vector<16x16xf32>
    %48 = arith.maximumf %46, %47 : vector<16x16xf32>
    %49 = arith.truncf %48 : vector<16x16xf32> to vector<16x16xbf16>
    %c0_36 = arith.constant 0 : index
    %c0_37 = arith.constant 0 : index
    %50 = vector.load %arg14[%c0_36, %c0_37] : memref<16x8xbf16, #tpu.memory_space<vmem>>, vector<16x8xbf16>
    %cst_38 = arith.constant dense<0.000000e+00> : vector<16x8xf32>
    %51 = tpu.matmul %49, %50, %cst_38 {dimension_numbers = #tpu.dot_dimension_numbers<[1], [0], [0], [1], [0, 0, 1, 1], [], []>} : vector<16x16xbf16>, vector<16x8xbf16>, vector<16x8xf32> -> vector<16x8xf32>
    %c0_39 = arith.constant 0 : index
    %c0_40 = arith.constant 0 : index
    %52 = vector.load %arg15[%c0_39, %c0_40] : memref<1x8xf32, #tpu.memory_space<vmem>>, vector<1x8xf32>
    %53 = vector.broadcast %52 : vector<1x8xf32> to vector<16x8xf32>
    %54 = arith.addf %51, %53 : vector<16x8xf32>
    %c0_41 = arith.constant 0 : index
    %c0_42 = arith.constant 0 : index
    %55 = vector.load %arg16[%c0_41, %c0_42] : memref<16x8xf32, #tpu.memory_space<vmem>>, vector<16x8xf32>
    tpu.vector_store %arg16[%c0_41, %c0_42], %54 {strides = array<i32>} : memref<16x8xf32, #tpu.memory_space<vmem>>, vector<16x8xf32>,
    return
  }
  func.func @transform_0(%arg0: i32) -> (i32, i32) {
    %c0_i32 = arith.constant 0 : i32
    %c0_i32_0 = arith.constant 0 : i32
    return %arg0, %c0_i32 : i32, i32
  }
  func.func @transform_1(%arg0: i32) -> (i32, i32) {
    %c0_i32 = arith.constant 0 : i32
    %c0_i32_0 = arith.constant 0 : i32
    %c0_i32_1 = arith.constant 0 : i32
    return %c0_i32, %c0_i32_0 : i32, i32
  }
  func.func @transform_2(%arg0: i32) -> (i32, i32) {
    %c0_i32 = arith.constant 0 : i32
    %c0_i32_0 = arith.constant 0 : i32
    %c0_i32_1 = arith.constant 0 : i32
    return %c0_i32, %c0_i32_0 : i32, i32
  }
  func.func @transform_3(%arg0: i32) -> (i32, i32) {
    %c0_i32 = arith.constant 0 : i32
    %c0_i32_0 = arith.constant 0 : i32
    %c0_i32_1 = arith.constant 0 : i32
    return %c0_i32, %c0_i32_0 : i32, i32
  }
  func.func @transform_4(%arg0: i32) -> (i32, i32) {
    %c0_i32 = arith.constant 0 : i32
    %c0_i32_0 = arith.constant 0 : i32
    %c0_i32_1 = arith.constant 0 : i32
    return %c0_i32, %c0_i32_0 : i32, i32
  }
  func.func @transform_5(%arg0: i32) -> (i32, i32) {
    %c0_i32 = arith.constant 0 : i32
    %c0_i32_0 = arith.constant 0 : i32
    %c0_i32_1 = arith.constant 0 : i32
    return %c0_i32, %c0_i32_0 : i32, i32
  }
  func.func @transform_6(%arg0: i32) -> (i32, i32) {
    %c0_i32 = arith.constant 0 : i32
    %c0_i32_0 = arith.constant 0 : i32
    %c0_i32_1 = arith.constant 0 : i32
    return %c0_i32, %c0_i32_0 : i32, i32
  }
  func.func @transform_7(%arg0: i32) -> (i32, i32) {
    %c0_i32 = arith.constant 0 : i32
    %c0_i32_0 = arith.constant 0 : i32
    %c0_i32_1 = arith.constant 0 : i32
    return %c0_i32, %c0_i32_0 : i32, i32
  }
  func.func @transform_8(%arg0: i32) -> (i32, i32) {
    %c0_i32 = arith.constant 0 : i32
    %c0_i32_0 = arith.constant 0 : i32
    %c0_i32_1 = arith.constant 0 : i32
    return %c0_i32, %c0_i32_0 : i32, i32
  }
  func.func @transform_9(%arg0: i32) -> (i32, i32) {
    %c0_i32 = arith.constant 0 : i32
    %c0_i32_0 = arith.constant 0 : i32
    %c0_i32_1 = arith.constant 0 : i32
    return %c0_i32, %c0_i32_0 : i32, i32
  }
  func.func @transform_10(%arg0: i32) -> (i32, i32) {
    %c0_i32 = arith.constant 0 : i32
    %c0_i32_0 = arith.constant 0 : i32
    %c0_i32_1 = arith.constant 0 : i32
    return %c0_i32, %c0_i32_0 : i32, i32
  }
  func.func @transform_11(%arg0: i32) -> (i32, i32) {
    %c0_i32 = arith.constant 0 : i32
    %c0_i32_0 = arith.constant 0 : i32
    %c0_i32_1 = arith.constant 0 : i32
    return %c0_i32, %c0_i32_0 : i32, i32
  }
  func.func @transform_12(%arg0: i32) -> (i32, i32) {
    %c0_i32 = arith.constant 0 : i32
    %c0_i32_0 = arith.constant 0 : i32
    %c0_i32_1 = arith.constant 0 : i32
    return %c0_i32, %c0_i32_0 : i32, i32
  }
  func.func @transform_13(%arg0: i32) -> (i32, i32) {
    %c0_i32 = arith.constant 0 : i32
    %c0_i32_0 = arith.constant 0 : i32
    %c0_i32_1 = arith.constant 0 : i32
    return %c0_i32, %c0_i32_0 : i32, i32
  }
  func.func @transform_14(%arg0: i32) -> (i32, i32) {
    %c0_i32 = arith.constant 0 : i32
    %c0_i32_0 = arith.constant 0 : i32
    %c0_i32_1 = arith.constant 0 : i32
    return %c0_i32, %c0_i32_0 : i32, i32
  }
  func.func @transform_15(%arg0: i32) -> (i32, i32) {
    %c0_i32 = arith.constant 0 : i32
    %c0_i32_0 = arith.constant 0 : i32
    return %arg0, %c0_i32 : i32, i32
  }
}

</mosaic_0001>

<llo_original>
// kernel: dynet_forward.1
$region0: #{dynet_forward.1}
  #allocation0 [shape = 'u32[]', space=smem, size = 0x4, offset = 0x4, fixed_abs, tag = 'smem constant byte address 0x4 - core index']
  #allocation1 [shape = 'u32[144,128]{1,0:T(1,128)}', space=vmem, size = 0x12000, scoped, tag = 'internal scratch']
  %s0 = inlined_call_operand.vmem [shape: f32[24,8], index: 0, kind: input, shape index: {}]
  %s1 = inlined_call_operand.vmem [shape: bf16[8,16], index: 1, kind: input, shape index: {}]
  %s2 = inlined_call_operand.vmem [shape: f32[1,16], index: 2, kind: input, shape index: {}]
  %s3 = inlined_call_operand.vmem [shape: bf16[16,32], index: 3, kind: input, shape index: {}]
  %s4 = inlined_call_operand.vmem [shape: f32[1,32], index: 4, kind: input, shape index: {}]
  %s5 = inlined_call_operand.vmem [shape: bf16[32,64], index: 5, kind: input, shape index: {}]
  %s6 = inlined_call_operand.vmem [shape: f32[1,64], index: 6, kind: input, shape index: {}]
  %s7 = inlined_call_operand.vmem [shape: bf16[64,128], index: 7, kind: input, shape index: {}]
  %s8 = inlined_call_operand.vmem [shape: f32[1,128], index: 8, kind: input, shape index: {}]
  %s9 = inlined_call_operand.vmem [shape: bf16[128,64], index: 9, kind: input, shape index: {}]
  %s10 = inlined_call_operand.vmem [shape: f32[1,64], index: 10, kind: input, shape index: {}]
  %s11 = inlined_call_operand.vmem [shape: bf16[64,16], index: 11, kind: input, shape index: {}]
  %s12 = inlined_call_operand.vmem [shape: f32[1,16], index: 12, kind: input, shape index: {}]
  %s13 = inlined_call_operand.vmem [shape: bf16[16,8], index: 13, kind: input, shape index: {}]
  %s14 = inlined_call_operand.vmem [shape: f32[1,8], index: 14, kind: input, shape index: {}]
  %s15 = inlined_call_operand.vmem [shape: f32[24,8], index: 15, kind: output, shape index: {}]
  %s16 = sld [smem:[#allocation0]]
  $region141: #{dynet_forward.1} parent=0
    _
  %s18 = ssub.s32 1, %s16
  %s19 = scalar_select 0, %s18, %s16
  $region1: #{dynet_forward.1} parent=0
    #allocation2 [shape = 'u8[16384]{0}', space=vmem, size = 0x4000, scoped, tag = 'output window, operand 0']
    loop: start=0, step=1, limit=4
    $region2: #{dynet_forward.1} parent=1 // loop_pre_header
      _
    $region3: #{dynet_forward.1} parent=1 // loop_header
      %s21 = sphi 0, %s25
      %p22 = scmp.ge.s32.totalorder %s21, 4
      %s31 = sphi 0, %s33
      %s34 = sphi 0, %s31
      %s35 = sphi 0, %s34
      %s51 = sphi 0, %s35
      %s55 = sphi 0, %s55
      %s57 = sphi 0, %s55
      %s58 = sphi 0, %s57
      %s72 = sphi 0, %s58
      %s76 = sphi 0, %s76
      %s78 = sphi 0, %s76
      %s79 = sphi 0, %s78
      %s93 = sphi 0, %s79
      %s97 = sphi 0, %s97
      %s99 = sphi 0, %s97
      %s100 = sphi 0, %s99
      %s114 = sphi 0, %s100
      %s118 = sphi 0, %s118
      %s120 = sphi 0, %s118
      %s121 = sphi 0, %s120
      %s135 = sphi 0, %s121
      %s139 = sphi 0, %s139
      %s141 = sphi 0, %s139
      %s142 = sphi 0, %s141
      %s156 = sphi 0, %s142
      %s160 = sphi 0, %s160
      %s162 = sphi 0, %s160
      %s163 = sphi 0, %s162
      %s177 = sphi 0, %s163
      %s181 = sphi 0, %s181
      %s183 = sphi 0, %s181
      %s184 = sphi 0, %s183
      %s198 = sphi 0, %s184
      %s202 = sphi 0, %s202
      %s204 = sphi 0, %s202
      %s205 = sphi 0, %s204
      %s219 = sphi 0, %s205
      %s223 = sphi 0, %s223
      %s225 = sphi 0, %s223
      %s226 = sphi 0, %s225
      %s240 = sphi 0, %s226
      %s244 = sphi 0, %s244
      %s246 = sphi 0, %s244
      %s247 = sphi 0, %s246
      %s261 = sphi 0, %s247
      %s265 = sphi 0, %s265
      %s267 = sphi 0, %s265
      %s268 = sphi 0, %s267
      %s282 = sphi 0, %s268
      %s286 = sphi 0, %s286
      %s288 = sphi 0, %s286
      %s289 = sphi 0, %s288
      %s303 = sphi 0, %s289
      %s307 = sphi 0, %s307
      %s309 = sphi 0, %s307
      %s310 = sphi 0, %s309
      %s324 = sphi 0, %s310
      %s328 = sphi 0, %s328
      %s330 = sphi 0, %s328
      %s331 = sphi 0, %s330
      %s345 = sphi 0, %s331
      %s351 = sphi 0, %s353
      %s354 = sphi 0, %s351
      %s355 = sphi 0, %s354
      %s371 = sphi 0, %s355
    $region4: #{dynet_forward.1} parent=1 // loop_header_branch
      %24 = sbr.rel (%p22) target = $region8
    $region5: #{dynet_forward.1} parent=1 // loop_body
      %s26 = ssub.s32 %s21, 1
      %s27 = ssub.s32 %s21, 2
      %s28 = sadd.s32 %s21, 1
      %s29 = ssub.s32 %s21, %s28
      %p30 = scmp.eq.s32.totalorder %s29, 0
      %s32 = sadd.s32 %s31, 1
      %s33 = scalar_select %p30, %s31, %s32
      %p36 = pneg %p30
      %p37 = scmp.eq.s32.totalorder %s21, 1
      %p38 = por %p36, %p37
      %p39 = scmp.ne.s32.totalorder %s31, %s34
      %p40 = scmp.eq.s32.totalorder %s21, 0
      %p41 = por %p39, %p40
      %p42 = scmp.ne.s32.totalorder %s31, %s34
      %p43 = scmp.eq.s32.totalorder %s26, 1
      %p44 = por %p42, %p43
      %p45 = scmp.ne.s32.totalorder %s34, %s35
      %p46 = scmp.eq.s32.totalorder %s26, 0
      %p47 = por %p45, %p46
      %p48 = scmp.ne.s32.totalorder %s34, %s35
      %p49 = scmp.eq.s32.totalorder %s27, 1
      %p50 = por %p48, %p49
      %p52 = scmp.ne.s32.totalorder %s35, %s51
      %p53 = scmp.eq.s32.totalorder %s27, 0
      %p54 = por %p52, %p53
      %s56 = sadd.s32 %s55, 1
      %p59 = scmp.eq.s32.totalorder %s21, 1
      %p60 = scmp.ne.s32.totalorder %s55, %s57
      %p61 = scmp.eq.s32.totalorder %s21, 0
      %p62 = por %p60, %p61
      %p63 = scmp.ne.s32.totalorder %s55, %s57
      %p64 = scmp.eq.s32.totalorder %s26, 1
      %p65 = por %p63, %p64
      %p66 = scmp.ne.s32.totalorder %s57, %s58
      %p67 = scmp.eq.s32.totalorder %s26, 0
      %p68 = por %p66, %p67
      %p69 = scmp.ne.s32.totalorder %s57, %s58
      %p70 = scmp.eq.s32.totalorder %s27, 1
      %p71 = por %p69, %p70
      %p73 = scmp.ne.s32.totalorder %s58, %s72
      %p74 = scmp.eq.s32.totalorder %s27, 0
      %p75 = por %p73, %p74
      %s77 = sadd.s32 %s76, 1
      %p80 = scmp.eq.s32.totalorder %s21, 1
      %p81 = scmp.ne.s32.totalorder %s76, %s78
      %p82 = scmp.eq.s32.totalorder %s21, 0
      %p83 = por %p81, %p82
      %p84 = scmp.ne.s32.totalorder %s76, %s78
      %p85 = scmp.eq.s32.totalorder %s26, 1
      %p86 = por %p84, %p85
      %p87 = scmp.ne.s32.totalorder %s78, %s79
      %p88 = scmp.eq.s32.totalorder %s26, 0
      %p89 = por %p87, %p88
      %p90 = scmp.ne.s32.totalorder %s78, %s79
      %p91 = scmp.eq.s32.totalorder %s27, 1
      %p92 = por %p90, %p91
      %p94 = scmp.ne.s32.totalorder %s79, %s93
      %p95 = scmp.eq.s32.totalorder %s27, 0
      %p96 = por %p94, %p95
      %s98 = sadd.s32 %s97, 1
      %p101 = scmp.eq.s32.totalorder %s21, 1
      %p102 = scmp.ne.s32.totalorder %s97, %s99
      %p103 = scmp.eq.s32.totalorder %s21, 0
      %p104 = por %p102, %p103
      %p105 = scmp.ne.s32.totalorder %s97, %s99
      %p106 = scmp.eq.s32.totalorder %s26, 1
      %p107 = por %p105, %p106
      %p108 = scmp.ne.s32.totalorder %s99, %s100
      %p109 = scmp.eq.s32.totalorder %s26, 0
      %p110 = por %p108, %p109
      %p111 = scmp.ne.s32.totalorder %s99, %s100
      %p112 = scmp.eq.s32.totalorder %s27, 1
      %p113 = por %p111, %p112
      %p115 = scmp.ne.s32.totalorder %s100, %s114
      %p116 = scmp.eq.s32.totalorder %s27, 0
      %p117 = por %p115, %p116
      %s119 = sadd.s32 %s118, 1
      %p122 = scmp.eq.s32.totalorder %s21, 1
      %p123 = scmp.ne.s32.totalorder %s118, %s120
      %p124 = scmp.eq.s32.totalorder %s21, 0
      %p125 = por %p123, %p124
      %p126 = scmp.ne.s32.totalorder %s118, %s120
      %p127 = scmp.eq.s32.totalorder %s26, 1
      %p128 = por %p126, %p127
      %p129 = scmp.ne.s32.totalorder %s120, %s121
      %p130 = scmp.eq.s32.totalorder %s26, 0
      %p131 = por %p129, %p130
      %p132 = scmp.ne.s32.totalorder %s120, %s121
      %p133 = scmp.eq.s32.totalorder %s27, 1
      %p134 = por %p132, %p133
      %p136 = scmp.ne.s32.totalorder %s121, %s135
      %p137 = scmp.eq.s32.totalorder %s27, 0
      %p138 = por %p136, %p137
      %s140 = sadd.s32 %s139, 1
      %p143 = scmp.eq.s32.totalorder %s21, 1
      %p144 = scmp.ne.s32.totalorder %s139, %s141
      %p145 = scmp.eq.s32.totalorder %s21, 0
      %p146 = por %p144, %p145
      %p147 = scmp.ne.s32.totalorder %s139, %s141
      %p148 = scmp.eq.s32.totalorder %s26, 1
      %p149 = por %p147, %p148
      %p150 = scmp.ne.s32.totalorder %s141, %s142
      %p151 = scmp.eq.s32.totalorder %s26, 0
      %p152 = por %p150, %p151
      %p153 = scmp.ne.s32.totalorder %s141, %s142
      %p154 = scmp.eq.s32.totalorder %s27, 1
      %p155 = por %p153, %p154
      %p157 = scmp.ne.s32.totalorder %s142, %s156
      %p158 = scmp.eq.s32.totalorder %s27, 0
      %p159 = por %p157, %p158
      %s161 = sadd.s32 %s160, 1
      %p164 = scmp.eq.s32.totalorder %s21, 1
      %p165 = scmp.ne.s32.totalorder %s160, %s162
      %p166 = scmp.eq.s32.totalorder %s21, 0
      %p167 = por %p165, %p166
      %p168 = scmp.ne.s32.totalorder %s160, %s162
      %p169 = scmp.eq.s32.totalorder %s26, 1
      %p170 = por %p168, %p169
      %p171 = scmp.ne.s32.totalorder %s162, %s163
      %p172 = scmp.eq.s32.totalorder %s26, 0
      %p173 = por %p171, %p172
      %p174 = scmp.ne.s32.totalorder %s162, %s163
      %p175 = scmp.eq.s32.totalorder %s27, 1
      %p176 = por %p174, %p175
      %p178 = scmp.ne.s32.totalorder %s163, %s177
      %p179 = scmp.eq.s32.totalorder %s27, 0
      %p180 = por %p178, %p179
      %s182 = sadd.s32 %s181, 1
      %p185 = scmp.eq.s32.totalorder %s21, 1
      %p186 = scmp.ne.s32.totalorder %s181, %s183
      %p187 = scmp.eq.s32.totalorder %s21, 0
      %p188 = por %p186, %p187
      %p189 = scmp.ne.s32.totalorder %s181, %s183
      %p190 = scmp.eq.s32.totalorder %s26, 1
      %p191 = por %p189, %p190
      %p192 = scmp.ne.s32.totalorder %s183, %s184
      %p193 = scmp.eq.s32.totalorder %s26, 0
      %p194 = por %p192, %p193
      %p195 = scmp.ne.s32.totalorder %s183, %s184
      %p196 = scmp.eq.s32.totalorder %s27, 1
      %p197 = por %p195, %p196
      %p199 = scmp.ne.s32.totalorder %s184, %s198
      %p200 = scmp.eq.s32.totalorder %s27, 0
      %p201 = por %p199, %p200
      %s203 = sadd.s32 %s202, 1
      %p206 = scmp.eq.s32.totalorder %s21, 1
      %p207 = scmp.ne.s32.totalorder %s202, %s204
      %p208 = scmp.eq.s32.totalorder %s21, 0
      %p209 = por %p207, %p208
      %p210 = scmp.ne.s32.totalorder %s202, %s204
      %p211 = scmp.eq.s32.totalorder %s26, 1
      %p212 = por %p210, %p211
      %p213 = scmp.ne.s32.totalorder %s204, %s205
      %p214 = scmp.eq.s32.totalorder %s26, 0
      %p215 = por %p213, %p214
      %p216 = scmp.ne.s32.totalorder %s204, %s205
      %p217 = scmp.eq.s32.totalorder %s27, 1
      %p218 = por %p216, %p217
      %p220 = scmp.ne.s32.totalorder %s205, %s219
      %p221 = scmp.eq.s32.totalorder %s27, 0
      %p222 = por %p220, %p221
      %s224 = sadd.s32 %s223, 1
      %p227 = scmp.eq.s32.totalorder %s21, 1
      %p228 = scmp.ne.s32.totalorder %s223, %s225
      %p229 = scmp.eq.s32.totalorder %s21, 0
      %p230 = por %p228, %p229
      %p231 = scmp.ne.s32.totalorder %s223, %s225
      %p232 = scmp.eq.s32.totalorder %s26, 1
      %p233 = por %p231, %p232
      %p234 = scmp.ne.s32.totalorder %s225, %s226
      %p235 = scmp.eq.s32.totalorder %s26, 0
      %p236 = por %p234, %p235
      %p237 = scmp.ne.s32.totalorder %s225, %s226
      %p238 = scmp.eq.s32.totalorder %s27, 1
      %p239 = por %p237, %p238
      %p241 = scmp.ne.s32.totalorder %s226, %s240
      %p242 = scmp.eq.s32.totalorder %s27, 0
      %p243 = por %p241, %p242
      %s245 = sadd.s32 %s244, 1
      %p248 = scmp.eq.s32.totalorder %s21, 1
      %p249 = scmp.ne.s32.totalorder %s244, %s246
      %p250 = scmp.eq.s32.totalorder %s21, 0
      %p251 = por %p249, %p250
      %p252 = scmp.ne.s32.totalorder %s244, %s246
      %p253 = scmp.eq.s32.totalorder %s26, 1
      %p254 = por %p252, %p253
      %p255 = scmp.ne.s32.totalorder %s246, %s247
      %p256 = scmp.eq.s32.totalorder %s26, 0
      %p257 = por %p255, %p256
      %p258 = scmp.ne.s32.totalorder %s246, %s247
      %p259 = scmp.eq.s32.totalorder %s27, 1
      %p260 = por %p258, %p259
      %p262 = scmp.ne.s32.totalorder %s247, %s261
      %p263 = scmp.eq.s32.totalorder %s27, 0
      %p264 = por %p262, %p263
      %s266 = sadd.s32 %s265, 1
      %p269 = scmp.eq.s32.totalorder %s21, 1
      %p270 = scmp.ne.s32.totalorder %s265, %s267
      %p271 = scmp.eq.s32.totalorder %s21, 0
      %p272 = por %p270, %p271
      %p273 = scmp.ne.s32.totalorder %s265, %s267
      %p274 = scmp.eq.s32.totalorder %s26, 1
      %p275 = por %p273, %p274
      %p276 = scmp.ne.s32.totalorder %s267, %s268
      %p277 = scmp.eq.s32.totalorder %s26, 0
      %p278 = por %p276, %p277
      %p279 = scmp.ne.s32.totalorder %s267, %s268
      %p280 = scmp.eq.s32.totalorder %s27, 1
      %p281 = por %p279, %p280
      %p283 = scmp.ne.s32.totalorder %s268, %s282
      %p284 = scmp.eq.s32.totalorder %s27, 0
      %p285 = por %p283, %p284
      %s287 = sadd.s32 %s286, 1
      %p290 = scmp.eq.s32.totalorder %s21, 1
      %p291 = scmp.ne.s32.totalorder %s286, %s288
      %p292 = scmp.eq.s32.totalorder %s21, 0
      %p293 = por %p291, %p292
      %p294 = scmp.ne.s32.totalorder %s286, %s288
      %p295 = scmp.eq.s32.totalorder %s26, 1
      %p296 = por %p294, %p295
      %p297 = scmp.ne.s32.totalorder %s288, %s289
      %p298 = scmp.eq.s32.totalorder %s26, 0
      %p299 = por %p297, %p298
      %p300 = scmp.ne.s32.totalorder %s288, %s289
      %p301 = scmp.eq.s32.totalorder %s27, 1
      %p302 = por %p300, %p301
      %p304 = scmp.ne.s32.totalorder %s289, %s303
      %p305 = scmp.eq.s32.totalorder %s27, 0
      %p306 = por %p304, %p305
      %s308 = sadd.s32 %s307, 1
      %p311 = scmp.eq.s32.totalorder %s21, 1
      %p312 = scmp.ne.s32.totalorder %s307, %s309
      %p313 = scmp.eq.s32.totalorder %s21, 0
      %p314 = por %p312, %p313
      %p315 = scmp.ne.s32.totalorder %s307, %s309
      %p316 = scmp.eq.s32.totalorder %s26, 1
      %p317 = por %p315, %p316
      %p318 = scmp.ne.s32.totalorder %s309, %s310
      %p319 = scmp.eq.s32.totalorder %s26, 0
      %p320 = por %p318, %p319
      %p321 = scmp.ne.s32.totalorder %s309, %s310
      %p322 = scmp.eq.s32.totalorder %s27, 1
      %p323 = por %p321, %p322
      %p325 = scmp.ne.s32.totalorder %s310, %s324
      %p326 = scmp.eq.s32.totalorder %s27, 0
      %p327 = por %p325, %p326
      %s329 = sadd.s32 %s328, 1
      %p332 = scmp.eq.s32.totalorder %s21, 1
      %p333 = scmp.ne.s32.totalorder %s328, %s330
      %p334 = scmp.eq.s32.totalorder %s21, 0
      %p335 = por %p333, %p334
      %p336 = scmp.ne.s32.totalorder %s328, %s330
      %p337 = scmp.eq.s32.totalorder %s26, 1
      %p338 = por %p336, %p337
      %p339 = scmp.ne.s32.totalorder %s330, %s331
      %p340 = scmp.eq.s32.totalorder %s26, 0
      %p341 = por %p339, %p340
      %p342 = scmp.ne.s32.totalorder %s330, %s331
      %p343 = scmp.eq.s32.totalorder %s27, 1
      %p344 = por %p342, %p343
      %p346 = scmp.ne.s32.totalorder %s331, %s345
      %p347 = scmp.eq.s32.totalorder %s27, 0
      %p348 = por %p346, %p347
      %s349 = ssub.s32 %s21, %s28
      %p350 = scmp.eq.s32.totalorder %s349, 0
      %s352 = sadd.s32 %s351, 1
      %s353 = scalar_select %p350, %s351, %s352
      %p356 = pneg %p350
      %p357 = scmp.eq.s32.totalorder %s21, 1
      %p358 = por %p356, %p357
      %p359 = scmp.ne.s32.totalorder %s351, %s354
      %p360 = scmp.eq.s32.totalorder %s21, 0
      %p361 = por %p359, %p360
      %p362 = scmp.ne.s32.totalorder %s351, %s354
      %p363 = scmp.eq.s32.totalorder %s26, 1
      %p364 = por %p362, %p363
      %p365 = scmp.ne.s32.totalorder %s354, %s355
      %p366 = scmp.eq.s32.totalorder %s26, 0
      %p367 = por %p365, %p366
      %p368 = scmp.ne.s32.totalorder %s354, %s355
      %p369 = scmp.eq.s32.totalorder %s27, 1
      %p370 = por %p368, %p369
      %p372 = scmp.ne.s32.totalorder %s355, %s371
      %p373 = scmp.eq.s32.totalorder %s27, 0
      %p374 = por %p372, %p373
      %p375 = scmp.le.s32.totalorder 1, %s21
      %p376 = scmp.lt.s32.totalorder %s21, 3
      %p377 = pnand %p375, %p376
      %p378 = pneg %p377
      // Predicated region
      $region9: #{dynet_forward.1} parent=5 // pred_check
        _
      $region10: #{dynet_forward.1} parent=5 // pred_check_branch
        %380 = sbr.rel (%p377) target = $region12
      $region11: #{dynet_forward.1} parent=5 // pred_region
        %s381 = ssub.s32 %s21, 1
        // Predicated region
        $region13: #{dynet_forward.1} parent=11 // pred_check
          %p382 = pneg %p68
        $region14: #{dynet_forward.1} parent=11 // pred_check_branch
          %384 = sbr.rel (%p382) target = $region16
        $region15: #{dynet_forward.1} parent=11 // pred_region
          _
        $region16: #{dynet_forward.1} parent=11 // pred_fallthru
          _
        // Predicated region
        $region17: #{dynet_forward.1} parent=11 // pred_check
          %p385 = pneg %p89
        $region18: #{dynet_forward.1} parent=11 // pred_check_branch
          %387 = sbr.rel (%p385) target = $region20
        $region19: #{dynet_forward.1} parent=11 // pred_region
          _
        $region20: #{dynet_forward.1} parent=11 // pred_fallthru
          _
        // Predicated region
        $region21: #{dynet_forward.1} parent=11 // pred_check
          %p388 = pneg %p110
        $region22: #{dynet_forward.1} parent=11 // pred_check_branch
          %390 = sbr.rel (%p388) target = $region24
        $region23: #{dynet_forward.1} parent=11 // pred_region
          _
        $region24: #{dynet_forward.1} parent=11 // pred_fallthru
          _
        // Predicated region
        $region25: #{dynet_forward.1} parent=11 // pred_check
          %p391 = pneg %p131
        $region26: #{dynet_forward.1} parent=11 // pred_check_branch
          %393 = sbr.rel (%p391) target = $region28
        $region27: #{dynet_forward.1} parent=11 // pred_region
          _
        $region28: #{dynet_forward.1} parent=11 // pred_fallthru
          _
        // Predicated region
        $region29: #{dynet_forward.1} parent=11 // pred_check
          %p394 = pneg %p152
        $region30: #{dynet_forward.1} parent=11 // pred_check_branch
          %396 = sbr.rel (%p394) target = $region32
        $region31: #{dynet_forward.1} parent=11 // pred_region
          _
        $region32: #{dynet_forward.1} parent=11 // pred_fallthru
          _
        // Predicated region
        $region33: #{dynet_forward.1} parent=11 // pred_check
          %p397 = pneg %p173
        $region34: #{dynet_forward.1} parent=11 // pred_check_branch
          %399 = sbr.rel (%p397) target = $region36
        $region35: #{dynet_forward.1} parent=11 // pred_region
          _
        $region36: #{dynet_forward.1} parent=11 // pred_fallthru
          _
        // Predicated region
        $region37: #{dynet_forward.1} parent=11 // pred_check
          %p400 = pneg %p194
        $region38: #{dynet_forward.1} parent=11 // pred_check_branch
          %402 = sbr.rel (%p400) target = $region40
        $region39: #{dynet_forward.1} parent=11 // pred_region
          _
        $region40: #{dynet_forward.1} parent=11 // pred_fallthru
          _
        // Predicated region
        $region41: #{dynet_forward.1} parent=11 // pred_check
          %p403 = pneg %p215
        $region42: #{dynet_forward.1} parent=11 // pred_check_branch
          %405 = sbr.rel (%p403) target = $region44
        $region43: #{dynet_forward.1} parent=11 // pred_region
          _
        $region44: #{dynet_forward.1} parent=11 // pred_fallthru
          _
        // Predicated region
        $region45: #{dynet_forward.1} parent=11 // pred_check
          %p406 = pneg %p236
        $region46: #{dynet_forward.1} parent=11 // pred_check_branch
          %408 = sbr.rel (%p406) target = $region48
        $region47: #{dynet_forward.1} parent=11 // pred_region
          _
        $region48: #{dynet_forward.1} parent=11 // pred_fallthru
          _
        // Predicated region
        $region49: #{dynet_forward.1} parent=11 // pred_check
          %p409 = pneg %p257
        $region50: #{dynet_forward.1} parent=11 // pred_check_branch
          %411 = sbr.rel (%p409) target = $region52
        $region51: #{dynet_forward.1} parent=11 // pred_region
          _
        $region52: #{dynet_forward.1} parent=11 // pred_fallthru
          _
        // Predicated region
        $region53: #{dynet_forward.1} parent=11 // pred_check
          %p412 = pneg %p278
        $region54: #{dynet_forward.1} parent=11 // pred_check_branch
          %414 = sbr.rel (%p412) target = $region56
        $region55: #{dynet_forward.1} parent=11 // pred_region
          _
        $region56: #{dynet_forward.1} parent=11 // pred_fallthru
          _
        // Predicated region
        $region57: #{dynet_forward.1} parent=11 // pred_check
          %p415 = pneg %p299
        $region58: #{dynet_forward.1} parent=11 // pred_check_branch
          %417 = sbr.rel (%p415) target = $region60
        $region59: #{dynet_forward.1} parent=11 // pred_region
          _
        $region60: #{dynet_forward.1} parent=11 // pred_fallthru
          _
        // Predicated region
        $region61: #{dynet_forward.1} parent=11 // pred_check
          %p418 = pneg %p320
        $region62: #{dynet_forward.1} parent=11 // pred_check_branch
          %420 = sbr.rel (%p418) target = $region64
        $region63: #{dynet_forward.1} parent=11 // pred_region
          _
        $region64: #{dynet_forward.1} parent=11 // pred_fallthru
          _
        // Predicated region
        $region65: #{dynet_forward.1} parent=11 // pred_check
          %p421 = pneg %p341
        $region66: #{dynet_forward.1} parent=11 // pred_check_branch
          %423 = sbr.rel (%p421) target = $region68
        $region67: #{dynet_forward.1} parent=11 // pred_region
          _
        $region68: #{dynet_forward.1} parent=11 // pred_fallthru
          _
      $region12: #{dynet_forward.1} parent=5 // pred_fallthru
        _
      %p424 = scmp.lt.s32.totalorder %s21, 2
      // Predicated region
      $region69: #{dynet_forward.1} parent=5 // pred_check
        %p425 = pneg %p424
      $region70: #{dynet_forward.1} parent=5 // pred_check_branch
        %427 = sbr.rel (%p425) target = $region72
      $region71: #{dynet_forward.1} parent=5 // pred_region
        // Predicated region
        $region73: #{dynet_forward.1} parent=71 // pred_check
          %p428 = pneg %p41
        $region74: #{dynet_forward.1} parent=71 // pred_check_branch
          %430 = sbr.rel (%p428) target = $region76
        $region75: #{dynet_forward.1} parent=71 // pred_region
          %s431 = smul.u32 2, %s21
          %s432 = ssub.s32 3, %s431
          %p433 = scmp.lt.s32.totalorder %s432, 2
          %s434 = scalar_select %p433, %s432, 2
          %s435 = smul.u32 128, %s434
          %p436 = scmp.lt.s32.totalorder %s431, 2
          %s437 = scalar_select %p436, %s431, 2
          %s438 = smul.addr %s437, 8
          %s439 = scalar_lea.vmem %s0, %s438
          %s440 = smul.u32 2, %s21
          %s441 = ssub.s32 3, %s440
          %p442 = scmp.lt.s32.totalorder %s441, 2
          %s443 = scalar_select %p442, %s441, 2
          %s444 = smul.u32 128, %s443
        $region76: #{dynet_forward.1} parent=71 // pred_fallthru
          _
      $region72: #{dynet_forward.1} parent=5 // pred_fallthru
        _
      %p445 = scmp.le.s32.totalorder 1, %s21
      %p446 = scmp.lt.s32.totalorder %s21, 3
      %p447 = pnand %p445, %p446
      %p448 = pneg %p447
      // Predicated region
      $region77: #{dynet_forward.1} parent=5 // pred_check
        _
      $region78: #{dynet_forward.1} parent=5 // pred_check_branch
        %450 = sbr.rel (%p447) target = $region80
      $region79: #{dynet_forward.1} parent=5 // pred_region
        %s451 = ssub.s32 %s21, 1
        %s452 = smul.u32 2, %s26
        %s453 = ssub.s32 3, %s452
        %p454 = scmp.lt.s32.totalorder %s453, 2
        %s455 = scalar_select %p454, %s453, 2
        %s456 = smul.u32 128, %s455
        %p457 = scmp.lt.s32.totalorder %s452, 2
        %s458 = scalar_select %p457, %s452, 2
        %s459 = smul.addr %s458, 8
        %s460 = scalar_lea.vmem %s0, %s459
        %p461 = pneg %p47
        %p462 = pneg %p44
        %p463 = pneg %p68
        %p464 = pneg %p65
        %p465 = pneg %p89
        %p466 = pneg %p86
        %p467 = pneg %p110
        %p468 = pneg %p107
        %p469 = pneg %p131
        %p470 = pneg %p128
        %p471 = pneg %p152
        %p472 = pneg %p149
        %p473 = pneg %p173
        %p474 = pneg %p170
        %p475 = pneg %p194
        %p476 = pneg %p191
        %p477 = pneg %p215
        %p478 = pneg %p212
        %p479 = pneg %p236
        %p480 = pneg %p233
        %p481 = pneg %p257
        %p482 = pneg %p254
        %p483 = pneg %p278
        %p484 = pneg %p275
        %p485 = pneg %p299
        %p486 = pneg %p296
        %p487 = pneg %p320
        %p488 = pneg %p317
        %p489 = pneg %p341
        %p490 = pneg %p338
        %p491 = pneg %p367
        %p492 = pneg %p364
        %s493 = sand.u32 %s354, 1
        %s494 = sand.u32 %s354, 1
        %s495 = smul.addr %s494, 16
        %s496 = scalar_lea.vmem [#allocation2], %s495
        %s497 = smul.u32 2, %s26
        %s498 = ssub.s32 3, %s497
        %p499 = scmp.lt.s32.totalorder %s498, 2
        %s500 = scalar_select %p499, %s498, 2
        %s501 = smul.u32 128, %s500
        %p502 = scmp.lt.s32.totalorder %s497, 2
        %s503 = scalar_select %p502, %s497, 2
        %s504 = smul.addr %s503, 8
        %s505 = scalar_lea.vmem %s0, %s504
        %s506 = smul.u32 2, %s26
        %s507 = ssub.s32 3, %s506
        %p508 = scmp.lt.s32.totalorder %s507, 2
        %s509 = scalar_select %p508, %s507, 2
        %s510 = smul.u32 128, %s509
        %s511 = smul.u32 2, %s26
        %s512 = ssub.s32 3, %s511
        %p513 = scmp.lt.s32.totalorder %s512, 2
        %s514 = scalar_select %p513, %s512, 2
        %s515 = smul.u32 128, %s514
        %v517 = vld [vmem:[%s505] sm:$0xff]
        %v518 = vld [vmem:[%s505 + $0x8] sm:$0xff]
        %v519 = vpack.c.bf16 %v518, %v517
        %v520 = vld [vmem:[%s1] sm:$0xf]
        %v521 = vld [vmem:[%s2] sm:$0x1]
        %v523 = vlaneseq
        %v524 = vshrl.u32 %v523, 7
        %v525 = vsub.s32 0, %v524
        %v526 = vrot.slane %v521, %v525
        %vm528 = vcmask 64512
        %v530 = vsel %vm528, %v519, 0
        %vm532 = vcmask 1043456
        %v534 = vsel %vm532, %v520, 0
        %536 = vmatprep.subr.bf16.mxu0 0
        %537 = vmatpush1.bf16.msra.mxu0 %v534
        %538 = vmatprep.subr.bf16.mxu0 0
        %539 = vmatpush1.bf16.msra.mxu0 0
        %540 = vmatprep.subr.bf16.mxu0 0
        %541 = vmatpush1.bf16.msra.mxu0 0
        %542 = vmatprep.subr.bf16.mxu0 0
        %543 = vmatpush1.bf16.msra.mxu0 0
        %544 = vmatprep.subr.bf16.mxu0 0
        %545 = vmatpush1.bf16.msra.mxu0 0
        %546 = vmatprep.subr.bf16.mxu0 0
        %547 = vmatpush1.bf16.msra.mxu0 0
        %548 = vmatprep.subr.bf16.mxu0 0
        %549 = vmatpush1.bf16.msra.mxu0 0
        %550 = vmatprep.subr.bf16.mxu0 0
        %551 = vmatpush1.bf16.msra.mxu0 0
        %552 = vmatprep.subr.bf16.mxu0 0
        %553 = vmatpush1.bf16.msra.mxu0 0
        %554 = vmatprep.subr.bf16.mxu0 0
        %555 = vmatpush1.bf16.msra.mxu0 0
        %556 = vmatprep.subr.bf16.mxu0 0
        %557 = vmatpush1.bf16.msra.mxu0 0
        %558 = vmatprep.subr.bf16.mxu0 0
        %559 = vmatpush1.bf16.msra.mxu0 0
        %560 = vmatprep.subr.bf16.mxu0 0
        %561 = vmatpush1.bf16.msra.mxu0 0
        %562 = vmatprep.subr.bf16.mxu0 0
        %563 = vmatpush1.bf16.msra.mxu0 0
        %564 = vmatprep.subr.bf16.mxu0 0
        %565 = vmatpush1.bf16.msra.mxu0 0
        %566 = vmatprep.subr.bf16.mxu0 0
        %567 = vmatpush1.bf16.msra.mxu0 0
        %568 = vmatprep.mubr.bf16.mxu0 0
        %569 = vmatmul.mubr.bf16.gmra.mrb[0].mxu0 %v530
        %v570 = vpop.f32.mrb[0].mxu0
        %v571 = vadd.f32 %v526, %v570
        %v572 = vpop.f32.mrb[0].mxu0
        %v573 = vpop.f32.mrb[0].mxu0
        %v574 = vadd.f32 %v526, %v573
        %v575 = vpop.f32.mrb[0].mxu0
        %576 = vdwg.mxu0
        %v577 = vmax.f32 %v571, 0.0
        %v578 = vmax.f32 %v574, 0.0
        %v579 = vpack.c.bf16 %v578, %v577
        %v580 = vld [vmem:[%s3] sm:$0xf]
        %v581 = vld [vmem:[%s3 + $0x4] sm:$0xf]
        %v582 = vld [vmem:[%s4] sm:$0x1]
        %v584 = vlaneseq
        %v585 = vshrl.u32 %v584, 7
        %v586 = vsub.s32 0, %v585
        %v587 = vrot.slane %v582, %v586
        %v591 = vunpack.c.l.b16 %v580
        %v592 = vunpack.c.l.b16 %v581
        %v593 = vpack.c.b16 %v592, %v591
        %vm595 = vcmask 130048
        %v597 = vsel %vm595, %v579, 0
        %599 = vmatprep.subr.bf16.mxu0 0
        %600 = vmatpush1.bf16.msra.mxu0 %v593
        %601 = vmatprep.subr.bf16.mxu0 0
        %602 = vmatpush1.bf16.msra.mxu0 0
        %603 = vmatprep.subr.bf16.mxu0 0
        %604 = vmatpush1.bf16.msra.mxu0 0
        %605 = vmatprep.subr.bf16.mxu0 0
        %606 = vmatpush1.bf16.msra.mxu0 0
        %607 = vmatprep.subr.bf16.mxu0 0
        %608 = vmatpush1.bf16.msra.mxu0 0
        %609 = vmatprep.subr.bf16.mxu0 0
        %610 = vmatpush1.bf16.msra.mxu0 0
        %611 = vmatprep.subr.bf16.mxu0 0
        %612 = vmatpush1.bf16.msra.mxu0 0
        %613 = vmatprep.subr.bf16.mxu0 0
        %614 = vmatpush1.bf16.msra.mxu0 0
        %615 = vmatprep.subr.bf16.mxu0 0
        %616 = vmatpush1.bf16.msra.mxu0 0
        %617 = vmatprep.subr.bf16.mxu0 0
        %618 = vmatpush1.bf16.msra.mxu0 0
        %619 = vmatprep.subr.bf16.mxu0 0
        %620 = vmatpush1.bf16.msra.mxu0 0
        %621 = vmatprep.subr.bf16.mxu0 0
        %622 = vmatpush1.bf16.msra.mxu0 0
        %623 = vmatprep.subr.bf16.mxu0 0
        %624 = vmatpush1.bf16.msra.mxu0 0
        %625 = vmatprep.subr.bf16.mxu0 0
        %626 = vmatpush1.bf16.msra.mxu0 0
        %627 = vmatprep.subr.bf16.mxu0 0
        %628 = vmatpush1.bf16.msra.mxu0 0
        %629 = vmatprep.subr.bf16.mxu0 0
        %630 = vmatpush1.bf16.msra.mxu0 0
        %631 = vmatprep.mubr.bf16.mxu0 0
        %632 = vmatmul.mubr.bf16.gmra.mrb[0].mxu0 %v597
        %v633 = vpop.f32.mrb[0].mxu0
        %v634 = vadd.f32 %v587, %v633
        %v635 = vpop.f32.mrb[0].mxu0
        %v636 = vpop.f32.mrb[0].mxu0
        %v637 = vadd.f32 %v587, %v636
        %v638 = vpop.f32.mrb[0].mxu0
        %639 = vdwg.mxu0
        %v640 = vmax.f32 %v634, 0.0
        %v641 = vmax.f32 %v637, 0.0
        %v642 = vpack.c.bf16 %v641, %v640
        %v643 = vld [vmem:[%s5] sm:$0xf]
        %v644 = vld [vmem:[%s5 + $0x4] sm:$0xf]
        %v645 = vld [vmem:[%s5 + $0x8] sm:$0xf]
        %v646 = vld [vmem:[%s5 + $0xc] sm:$0xf]
        %v647 = vld [vmem:[%s6] sm:$0x1]
        %v649 = vlaneseq
        %v650 = vshrl.u32 %v649, 7
        %v651 = vsub.s32 0, %v650
        %v652 = vrot.slane %v647, %v651
        %v658 = vunpack.c.l.b16 %v643
        %v659 = vunpack.c.l.b16 %v644
        %v660 = vunpack.c.l.b16 %v645
        %v661 = vunpack.c.l.b16 %v646
        %v662 = vpack.c.b16 %v659, %v658
        %v663 = vpack.c.b16 %v661, %v660
        %vm666 = vcmask 261120
        %v668 = vsel %vm666, %v642, 0
        %670 = vmatprep.subr.bf16.mxu0 0
        %671 = vmatpush1.bf16.msra.mxu0 %v662
        %672 = vmatprep.subr.bf16.mxu0 0
        %673 = vmatpush1.bf16.msra.mxu0 %v663
        %674 = vmatprep.subr.bf16.mxu0 0
        %675 = vmatpush1.bf16.msra.mxu0 0
        %676 = vmatprep.subr.bf16.mxu0 0
        %677 = vmatpush1.bf16.msra.mxu0 0
        %678 = vmatprep.subr.bf16.mxu0 0
        %679 = vmatpush1.bf16.msra.mxu0 0
        %680 = vmatprep.subr.bf16.mxu0 0
        %681 = vmatpush1.bf16.msra.mxu0 0
        %682 = vmatprep.subr.bf16.mxu0 0
        %683 = vmatpush1.bf16.msra.mxu0 0
        %684 = vmatprep.subr.bf16.mxu0 0
        %685 = vmatpush1.bf16.msra.mxu0 0
        %686 = vmatprep.subr.bf16.mxu0 0
        %687 = vmatpush1.bf16.msra.mxu0 0
        %688 = vmatprep.subr.bf16.mxu0 0
        %689 = vmatpush1.bf16.msra.mxu0 0
        %690 = vmatprep.subr.bf16.mxu0 0
        %691 = vmatpush1.bf16.msra.mxu0 0
        %692 = vmatprep.subr.bf16.mxu0 0
        %693 = vmatpush1.bf16.msra.mxu0 0
        %694 = vmatprep.subr.bf16.mxu0 0
        %695 = vmatpush1.bf16.msra.mxu0 0
        %696 = vmatprep.subr.bf16.mxu0 0
        %697 = vmatpush1.bf16.msra.mxu0 0
        %698 = vmatprep.subr.bf16.mxu0 0
        %699 = vmatpush1.bf16.msra.mxu0 0
        %700 = vmatprep.subr.bf16.mxu0 0
        %701 = vmatpush1.bf16.msra.mxu0 0
        %702 = vmatprep.mubr.bf16.mxu0 0
        %703 = vmatmul.mubr.bf16.gmra.mrb[0].mxu0 %v668
        %v704 = vpop.f32.mrb[0].mxu0
        %v705 = vadd.f32 %v652, %v704
        %v706 = vpop.f32.mrb[0].mxu0
        %v707 = vpop.f32.mrb[0].mxu0
        %v708 = vadd.f32 %v652, %v707
        %v709 = vpop.f32.mrb[0].mxu0
        %710 = vdwg.mxu0
        %v711 = vmax.f32 %v705, 0.0
        %v712 = vmax.f32 %v708, 0.0
        %v713 = vpack.c.bf16 %v712, %v711
        %v714 = vld [vmem:[%s7] sm:$0xf]
        %v715 = vld [vmem:[%s7 + $0x4] sm:$0xf]
        %v716 = vld [vmem:[%s7 + $0x8] sm:$0xf]
        %v717 = vld [vmem:[%s7 + $0xc] sm:$0xf]
        %v718 = vld [vmem:[%s7 + $0x10] sm:$0xf]
        %v719 = vld [vmem:[%s7 + $0x14] sm:$0xf]
        %v720 = vld [vmem:[%s7 + $0x18] sm:$0xf]
        %v721 = vld [vmem:[%s7 + $0x1c] sm:$0xf]
        %v722 = vld [vmem:[%s8] sm:$0x1]
        %v724 = vlaneseq
        %v725 = vshrl.u32 %v724, 7
        %v726 = vsub.s32 0, %v725
        %v727 = vrot.slane %v722, %v726
        %v737 = vunpack.c.l.b16 %v714
        %v738 = vunpack.c.l.b16 %v715
        %v739 = vunpack.c.l.b16 %v716
        %v740 = vunpack.c.l.b16 %v717
        %v741 = vunpack.c.l.b16 %v718
        %v742 = vunpack.c.l.b16 %v719
        %v743 = vunpack.c.l.b16 %v720
        %v744 = vunpack.c.l.b16 %v721
        %v745 = vpack.c.b16 %v738, %v737
        %v746 = vpack.c.b16 %v740, %v739
        %v747 = vpack.c.b16 %v742, %v741
        %v748 = vpack.c.b16 %v744, %v743
        %vm753 = vcmask 523264
        %v755 = vsel %vm753, %v713, 0
        %757 = vmatprep.subr.bf16.mxu0 0
        %758 = vmatpush1.bf16.msra.mxu0 %v745
        %759 = vmatprep.subr.bf16.mxu0 0
        %760 = vmatpush1.bf16.msra.mxu0 %v746
        %761 = vmatprep.subr.bf16.mxu0 0
        %762 = vmatpush1.bf16.msra.mxu0 %v747
        %763 = vmatprep.subr.bf16.mxu0 0
        %764 = vmatpush1.bf16.msra.mxu0 %v748
        %765 = vmatprep.subr.bf16.mxu0 0
        %766 = vmatpush1.bf16.msra.mxu0 0
        %767 = vmatprep.subr.bf16.mxu0 0
        %768 = vmatpush1.bf16.msra.mxu0 0
        %769 = vmatprep.subr.bf16.mxu0 0
        %770 = vmatpush1.bf16.msra.mxu0 0
        %771 = vmatprep.subr.bf16.mxu0 0
        %772 = vmatpush1.bf16.msra.mxu0 0
        %773 = vmatprep.subr.bf16.mxu0 0
        %774 = vmatpush1.bf16.msra.mxu0 0
        %775 = vmatprep.subr.bf16.mxu0 0
        %776 = vmatpush1.bf16.msra.mxu0 0
        %777 = vmatprep.subr.bf16.mxu0 0
        %778 = vmatpush1.bf16.msra.mxu0 0
        %779 = vmatprep.subr.bf16.mxu0 0
        %780 = vmatpush1.bf16.msra.mxu0 0
        %781 = vmatprep.subr.bf16.mxu0 0
        %782 = vmatpush1.bf16.msra.mxu0 0
        %783 = vmatprep.subr.bf16.mxu0 0
        %784 = vmatpush1.bf16.msra.mxu0 0
        %785 = vmatprep.subr.bf16.mxu0 0
        %786 = vmatpush1.bf16.msra.mxu0 0
        %787 = vmatprep.subr.bf16.mxu0 0
        %788 = vmatpush1.bf16.msra.mxu0 0
        %789 = vmatprep.mubr.bf16.mxu0 0
        %790 = vmatmul.mubr.bf16.gmra.mrb[0].mxu0 %v755
        %v791 = vpop.f32.mrb[0].mxu0
        %v792 = vadd.f32 %v727, %v791
        %v793 = vpop.f32.mrb[0].mxu0
        %v794 = vpop.f32.mrb[0].mxu0
        %v795 = vadd.f32 %v727, %v794
        %v796 = vpop.f32.mrb[0].mxu0
        %797 = vdwg.mxu0
        %v798 = vmax.f32 %v792, 0.0
        %v799 = vmax.f32 %v795, 0.0
        %v800 = vpack.c.bf16 %v799, %v798
        %v801 = vld [vmem:[%s9] sm:$0xf]
        %v802 = vld [vmem:[%s9 + $0x4] sm:$0xf]
        %v803 = vld [vmem:[%s9 + $0x8] sm:$0xf]
        %v804 = vld [vmem:[%s9 + $0xc] sm:$0xf]
        %v805 = vld [vmem:[%s9 + $0x10] sm:$0xf]
        %v806 = vld [vmem:[%s9 + $0x14] sm:$0xf]
        %v807 = vld [vmem:[%s9 + $0x18] sm:$0xf]
        %v808 = vld [vmem:[%s9 + $0x1c] sm:$0xf]
        %v809 = vld [vmem:[%s9 + $0x20] sm:$0xf]
        %v810 = vld [vmem:[%s9 + $0x24] sm:$0xf]
        %v811 = vld [vmem:[%s9 + $0x28] sm:$0xf]
        %v812 = vld [vmem:[%s9 + $0x2c] sm:$0xf]
        %v813 = vld [vmem:[%s9 + $0x30] sm:$0xf]
        %v814 = vld [vmem:[%s9 + $0x34] sm:$0xf]
        %v815 = vld [vmem:[%s9 + $0x38] sm:$0xf]
        %v816 = vld [vmem:[%s9 + $0x3c] sm:$0xf]
        %v817 = vld [vmem:[%s10] sm:$0x1]
        %v819 = vlaneseq
        %v820 = vshrl.u32 %v819, 7
        %v821 = vsub.s32 0, %v820
        %v822 = vrot.slane %v817, %v821
        %v840 = vunpack.c.l.b16 %v801
        %v841 = vunpack.c.l.b16 %v802
        %v842 = vunpack.c.l.b16 %v803
        %v843 = vunpack.c.l.b16 %v804
        %v844 = vunpack.c.l.b16 %v805
        %v845 = vunpack.c.l.b16 %v806
        %v846 = vunpack.c.l.b16 %v807
        %v847 = vunpack.c.l.b16 %v808
        %v848 = vunpack.c.l.b16 %v809
        %v849 = vunpack.c.l.b16 %v810
        %v850 = vunpack.c.l.b16 %v811
        %v851 = vunpack.c.l.b16 %v812
        %v852 = vunpack.c.l.b16 %v813
        %v853 = vunpack.c.l.b16 %v814
        %v854 = vunpack.c.l.b16 %v815
        %v855 = vunpack.c.l.b16 %v816
        %v856 = vpack.c.b16 %v841, %v840
        %v857 = vpack.c.b16 %v843, %v842
        %v858 = vpack.c.b16 %v845, %v844
        %v859 = vpack.c.b16 %v847, %v846
        %v860 = vpack.c.b16 %v849, %v848
        %v861 = vpack.c.b16 %v851, %v850
        %v862 = vpack.c.b16 %v853, %v852
        %v863 = vpack.c.b16 %v855, %v854
        %872 = vmatprep.subr.bf16.mxu0 0
        %873 = vmatpush1.bf16.msra.mxu0 %v856
        %874 = vmatprep.subr.bf16.mxu0 0
        %875 = vmatpush1.bf16.msra.mxu0 %v857
        %876 = vmatprep.subr.bf16.mxu0 0
        %877 = vmatpush1.bf16.msra.mxu0 %v858
        %878 = vmatprep.subr.bf16.mxu0 0
        %879 = vmatpush1.bf16.msra.mxu0 %v859
        %880 = vmatprep.subr.bf16.mxu0 0
        %881 = vmatpush1.bf16.msra.mxu0 %v860
        %882 = vmatprep.subr.bf16.mxu0 0
        %883 = vmatpush1.bf16.msra.mxu0 %v861
        %884 = vmatprep.subr.bf16.mxu0 0
        %885 = vmatpush1.bf16.msra.mxu0 %v862
        %886 = vmatprep.subr.bf16.mxu0 0
        %887 = vmatpush1.bf16.msra.mxu0 %v863
        %888 = vmatprep.subr.bf16.mxu0 0
        %889 = vmatpush1.bf16.msra.mxu0 0
        %890 = vmatprep.subr.bf16.mxu0 0
        %891 = vmatpush1.bf16.msra.mxu0 0
        %892 = vmatprep.subr.bf16.mxu0 0
        %893 = vmatpush1.bf16.msra.mxu0 0
        %894 = vmatprep.subr.bf16.mxu0 0
        %895 = vmatpush1.bf16.msra.mxu0 0
        %896 = vmatprep.subr.bf16.mxu0 0
        %897 = vmatpush1.bf16.msra.mxu0 0
        %898 = vmatprep.subr.bf16.mxu0 0
        %899 = vmatpush1.bf16.msra.mxu0 0
        %900 = vmatprep.subr.bf16.mxu0 0
        %901 = vmatpush1.bf16.msra.mxu0 0
        %902 = vmatprep.subr.bf16.mxu0 0
        %903 = vmatpush1.bf16.msra.mxu0 0
        %904 = vmatprep.mubr.bf16.mxu0 0
        %905 = vmatmul.mubr.bf16.gmra.mrb[0].mxu0 %v800
        %v906 = vpop.f32.mrb[0].mxu0
        %v907 = vadd.f32 %v822, %v906
        %v908 = vpop.f32.mrb[0].mxu0
        %v909 = vpop.f32.mrb[0].mxu0
        %v910 = vadd.f32 %v822, %v909
        %v911 = vpop.f32.mrb[0].mxu0
        %912 = vdwg.mxu0
        %v913 = vmax.f32 %v907, 0.0
        %v914 = vmax.f32 %v910, 0.0
        %v915 = vpack.c.bf16 %v914, %v913
        %v916 = vld [vmem:[%s11] sm:$0xf]
        %v917 = vld [vmem:[%s11 + $0x4] sm:$0xf]
        %v918 = vld [vmem:[%s11 + $0x8] sm:$0xf]
        %v919 = vld [vmem:[%s11 + $0xc] sm:$0xf]
        %v920 = vld [vmem:[%s11 + $0x10] sm:$0xf]
        %v921 = vld [vmem:[%s11 + $0x14] sm:$0xf]
        %v922 = vld [vmem:[%s11 + $0x18] sm:$0xf]
        %v923 = vld [vmem:[%s11 + $0x1c] sm:$0xf]
        %v924 = vld [vmem:[%s12] sm:$0x1]
        %v926 = vlaneseq
        %v927 = vshrl.u32 %v926, 7
        %v928 = vsub.s32 0, %v927
        %v929 = vrot.slane %v924, %v928
        %v939 = vunpack.c.l.b16 %v916
        %v940 = vunpack.c.l.b16 %v917
        %v941 = vunpack.c.l.b16 %v918
        %v942 = vunpack.c.l.b16 %v919
        %v943 = vunpack.c.l.b16 %v920
        %v944 = vunpack.c.l.b16 %v921
        %v945 = vunpack.c.l.b16 %v922
        %v946 = vunpack.c.l.b16 %v923
        %v947 = vpack.c.b16 %v940, %v939
        %v948 = vpack.c.b16 %v942, %v941
        %v949 = vpack.c.b16 %v944, %v943
        %v950 = vpack.c.b16 %v946, %v945
        %v956 = vsel %vm753, %v915, 0
        %958 = vmatprep.subr.bf16.mxu0 0
        %959 = vmatpush1.bf16.msra.mxu0 %v947
        %960 = vmatprep.subr.bf16.mxu0 0
        %961 = vmatpush1.bf16.msra.mxu0 %v948
        %962 = vmatprep.subr.bf16.mxu0 0
        %963 = vmatpush1.bf16.msra.mxu0 %v949
        %964 = vmatprep.subr.bf16.mxu0 0
        %965 = vmatpush1.bf16.msra.mxu0 %v950
        %966 = vmatprep.subr.bf16.mxu0 0
        %967 = vmatpush1.bf16.msra.mxu0 0
        %968 = vmatprep.subr.bf16.mxu0 0
        %969 = vmatpush1.bf16.msra.mxu0 0
        %970 = vmatprep.subr.bf16.mxu0 0
        %971 = vmatpush1.bf16.msra.mxu0 0
        %972 = vmatprep.subr.bf16.mxu0 0
        %973 = vmatpush1.bf16.msra.mxu0 0
        %974 = vmatprep.subr.bf16.mxu0 0
        %975 = vmatpush1.bf16.msra.mxu0 0
        %976 = vmatprep.subr.bf16.mxu0 0
        %977 = vmatpush1.bf16.msra.mxu0 0
        %978 = vmatprep.subr.bf16.mxu0 0
        %979 = vmatpush1.bf16.msra.mxu0 0
        %980 = vmatprep.subr.bf16.mxu0 0
        %981 = vmatpush1.bf16.msra.mxu0 0
        %982 = vmatprep.subr.bf16.mxu0 0
        %983 = vmatpush1.bf16.msra.mxu0 0
        %984 = vmatprep.subr.bf16.mxu0 0
        %985 = vmatpush1.bf16.msra.mxu0 0
        %986 = vmatprep.subr.bf16.mxu0 0
        %987 = vmatpush1.bf16.msra.mxu0 0
        %988 = vmatprep.subr.bf16.mxu0 0
        %989 = vmatpush1.bf16.msra.mxu0 0
        %990 = vmatprep.mubr.bf16.mxu0 0
        %991 = vmatmul.mubr.bf16.gmra.mrb[0].mxu0 %v956
        %v992 = vpop.f32.mrb[0].mxu0
        %v993 = vadd.f32 %v929, %v992
        %v994 = vpop.f32.mrb[0].mxu0
        %v995 = vpop.f32.mrb[0].mxu0
        %v996 = vadd.f32 %v929, %v995
        %v997 = vpop.f32.mrb[0].mxu0
        %998 = vdwg.mxu0
        %v999 = vmax.f32 %v993, 0.0
        %v1000 = vmax.f32 %v996, 0.0
        %v1001 = vpack.c.bf16 %v1000, %v999
        %v1002 = vld [vmem:[%s13] sm:$0xf]
        %v1003 = vld [vmem:[%s13 + $0x4] sm:$0xf]
        %v1004 = vld [vmem:[%s14] sm:$0x1]
        %v1006 = vlaneseq
        %v1007 = vshrl.u32 %v1006, 7
        %v1008 = vsub.s32 0, %v1007
        %v1009 = vrot.slane %v1004, %v1008
        %v1013 = vunpack.c.l.b16 %v1002
        %v1014 = vunpack.c.l.b16 %v1003
        %v1015 = vpack.c.b16 %v1014, %v1013
        %v1018 = vsel %vm595, %v1001, 0
        %1020 = vmatprep.subr.bf16.mxu0 0
        %1021 = vmatpush1.bf16.msra.mxu0 %v1015
        %1022 = vmatprep.subr.bf16.mxu0 0
        %1023 = vmatpush1.bf16.msra.mxu0 0
        %1024 = vmatprep.subr.bf16.mxu0 0
        %1025 = vmatpush1.bf16.msra.mxu0 0
        %1026 = vmatprep.subr.bf16.mxu0 0
        %1027 = vmatpush1.bf16.msra.mxu0 0
        %1028 = vmatprep.subr.bf16.mxu0 0
        %1029 = vmatpush1.bf16.msra.mxu0 0
        %1030 = vmatprep.subr.bf16.mxu0 0
        %1031 = vmatpush1.bf16.msra.mxu0 0
        %1032 = vmatprep.subr.bf16.mxu0 0
        %1033 = vmatpush1.bf16.msra.mxu0 0
        %1034 = vmatprep.subr.bf16.mxu0 0
        %1035 = vmatpush1.bf16.msra.mxu0 0
        %1036 = vmatprep.subr.bf16.mxu0 0
        %1037 = vmatpush1.bf16.msra.mxu0 0
        %1038 = vmatprep.subr.bf16.mxu0 0
        %1039 = vmatpush1.bf16.msra.mxu0 0
        %1040 = vmatprep.subr.bf16.mxu0 0
        %1041 = vmatpush1.bf16.msra.mxu0 0
        %1042 = vmatprep.subr.bf16.mxu0 0
        %1043 = vmatpush1.bf16.msra.mxu0 0
        %1044 = vmatprep.subr.bf16.mxu0 0
        %1045 = vmatpush1.bf16.msra.mxu0 0
        %1046 = vmatprep.subr.bf16.mxu0 0
        %1047 = vmatpush1.bf16.msra.mxu0 0
        %1048 = vmatprep.subr.bf16.mxu0 0
        %1049 = vmatpush1.bf16.msra.mxu0 0
        %1050 = vmatprep.subr.bf16.mxu0 0
        %1051 = vmatpush1.bf16.msra.mxu0 0
        %1052 = vmatprep.mubr.bf16.mxu0 0
        %1053 = vmatmul.mubr.bf16.gmra.mrb[0].mxu0 %v1018
        %v1054 = vpop.f32.mrb[0].mxu0
        %v1055 = vadd.f32 %v1009, %v1054
        %v1056 = vpop.f32.mrb[0].mxu0
        %v1057 = vpop.f32.mrb[0].mxu0
        %v1058 = vadd.f32 %v1009, %v1057
        %v1059 = vpop.f32.mrb[0].mxu0
        %1060 = vdwg.mxu0
        %1061 = vst.msk [vmem:[%s496] sm:$0xff] %vm528, %v1055
        %1062 = vst.msk [vmem:[%s496 + $0x8] sm:$0xff] %vm528, %v1058
        %s1063 = sand.u32 %s354, 1
        %s1064 = sand.u32 %s354, 1
        %s1065 = smul.addr %s1064, 16
        %s1066 = scalar_lea.vmem [#allocation2], %s1065
        // Predicated region
        $region81: #{dynet_forward.1} parent=79 // pred_check
          %p1067 = pneg %p364
        $region82: #{dynet_forward.1} parent=79 // pred_check_branch
          %1069 = sbr.rel (%p1067) target = $region84
        $region83: #{dynet_forward.1} parent=79 // pred_region
          %s1070 = smul.u32 2, %s26
          %s1071 = ssub.s32 3, %s1070
          %p1072 = scmp.lt.s32.totalorder %s1071, 2
          %s1073 = scalar_select %p1072, %s1071, 2
          %s1074 = smul.u32 128, %s1073
          %p1075 = scmp.ne.s32.totalorder 0, %s1074
          %s1076 = smul.addr %s1070, 8
          %s1077 = scalar_lea.vmem %s15, %s1076
          // Predicated region
          $region85: #{dynet_forward.1} parent=83 // pred_check
            %p1078 = pneg %p1075
          $region86: #{dynet_forward.1} parent=83 // pred_check_branch
            %1080 = sbr.rel (%p1078) target = $region88
          $region87: #{dynet_forward.1} parent=83 // pred_region
            // Predicated region
            $region89: #{dynet_forward.1} parent=87 // pred_check
              _
            $region90: #{dynet_forward.1} parent=87 // pred_check_branch
              %1082 = sbr.rel (0) target = $region92
            $region91: #{dynet_forward.1} parent=87 // pred_region
              // Predicated region
              $region111: #{dynet_forward.1} parent=91 // pred_check
                _
              $region112: #{dynet_forward.1} parent=91 // pred_check_branch
                %1133 = sbr.rel (0) target = $region114
              $region113: #{dynet_forward.1} parent=91 // pred_region
                %s1134 = sshrl.u32 %s1073, 1
                // While loop
                $region115: #{dynet_forward.1} parent=113 // loop_pre_header
                  _
                $region116: #{dynet_forward.1} parent=113 // loop_header
                  %s1136 = sphi 0, %s1138
                  %p1137 = scmp.ge.s32.totalorder %s1136, %s1134
                  %s1141 = sphi 0, %s1150
                  %s1142 = sphi %s1066, %s1153
                  %s1143 = sphi %s1077, %s1154
                $region117: #{dynet_forward.1} parent=113 // loop_header_branch
                  %1140 = sbr.rel (%p1137) target = $region121
                $region118: #{dynet_forward.1} parent=113 // loop_body
                  %v1144 = vld [vmem:[%s1142] sm:$0xff]
                  %1145 = vst [vmem:[%s1143] sm:$0xff] %v1144
                  %v1146 = vld [vmem:[%s1142 + $0x8] sm:$0xff]
                  %1147 = vst [vmem:[%s1143 + $0x8] sm:$0xff] %v1146
                  %s1148 = sadd.s32 1, %s1141
                  %p1149 = scmp.ge.s32.totalorder %s1148, %s1134
                  %s1150 = scalar_select %p1149, 0, %s1148
                  %s1151 = smul.u32 %s1150, 16
                  %s1152 = smul.u32 %s1150, 16
                  %s1153 = scalar_lea.vmem %s1066, %s1151 [#allocation2]
                  %s1154 = scalar_lea.vmem %s1077, %s1152
                $region119: #{dynet_forward.1} parent=113 // loop_footer
                  %s1138 = sadd.s32 %s1136, 1
                $region120: #{dynet_forward.1} parent=113 // loop_footer_branch
                  %1135 = sbr.rel target = $region116
                $region121: #{dynet_forward.1} parent=113 // loop_exit
                  _
                %s1155 = sshrl.u32 %s1073, 1
                %s1156 = sand.u32 %s1073, 1
                %s1157 = smul.u32 %s1155, 2
                %s1158 = smul.u32 8, %s1157
                %s1159 = scalar_lea.vmem %s1066, %s1158 [#allocation2]
                %s1160 = smul.u32 8, %s1157
                %s1161 = scalar_lea.vmem %s1077, %s1160
                // While loop
                $region122: #{dynet_forward.1} parent=113 // loop_pre_header
                  _
                $region123: #{dynet_forward.1} parent=113 // loop_header
                  %s1163 = sphi 0, %s1165
                  %p1164 = scmp.ge.s32.totalorder %s1163, %s1156
                  %s1168 = sphi 0, %s1175
                  %s1169 = sphi %s1159, %s1178
                  %s1170 = sphi %s1161, %s1179
                $region124: #{dynet_forward.1} parent=113 // loop_header_branch
                  %1167 = sbr.rel (%p1164) target = $region128
                $region125: #{dynet_forward.1} parent=113 // loop_body
                  %v1171 = vld [vmem:[%s1169] sm:$0xff]
                  %1172 = vst [vmem:[%s1170] sm:$0xff] %v1171
                  %s1173 = sadd.s32 1, %s1168
                  %p1174 = scmp.ge.s32.totalorder %s1173, %s1156
                  %s1175 = scalar_select %p1174, 0, %s1173
                  %s1176 = smul.u32 %s1175, 8
                  %s1177 = smul.u32 %s1175, 8
                  %s1178 = scalar_lea.vmem %s1159, %s1176 [#allocation2]
                  %s1179 = scalar_lea.vmem %s1161, %s1177
                $region126: #{dynet_forward.1} parent=113 // loop_footer
                  %s1165 = sadd.s32 %s1163, 1
                $region127: #{dynet_forward.1} parent=113 // loop_footer_branch
                  %1162 = sbr.rel target = $region123
                $region128: #{dynet_forward.1} parent=113 // loop_exit
                  _
              $region114: #{dynet_forward.1} parent=91 // pred_fallthru
                _
              // Predicated region
              $region129: #{dynet_forward.1} parent=91 // pred_check
                _
              $region130: #{dynet_forward.1} parent=91 // pred_check_branch
                %1181 = sbr.rel target = $region132
              $region131: #{dynet_forward.1} parent=91 // pred_region
                _
              $region132: #{dynet_forward.1} parent=91 // pred_fallthru
                _
            $region92: #{dynet_forward.1} parent=87 // pred_fallthru
              _
            // Predicated region
            $region93: #{dynet_forward.1} parent=87 // pred_check
              _
            $region94: #{dynet_forward.1} parent=87 // pred_check_branch
              %1084 = sbr.rel target = $region96
            $region95: #{dynet_forward.1} parent=87 // pred_region
              %s1086 = sshrl.u32 %s1073, 1
              // While loop
              $region97: #{dynet_forward.1} parent=95 // loop_pre_header
                _
              $region98: #{dynet_forward.1} parent=95 // loop_header
                %s1088 = sphi 0, %s1090
                %p1089 = scmp.ge.s32.totalorder %s1088, %s1086
                %s1093 = sphi 0, %s1102
                %s1094 = sphi %s1066, %s1105
                %s1095 = sphi %s1077, %s1106
              $region99: #{dynet_forward.1} parent=95 // loop_header_branch
                %1092 = sbr.rel (%p1089) target = $region103
              $region100: #{dynet_forward.1} parent=95 // loop_body
                %v1096 = vld [vmem:[%s1094] sm:$0xff]
                %1097 = vst [vmem:[%s1095] sm:$0xff] %v1096
                %v1098 = vld [vmem:[%s1094 + $0x8] sm:$0xff]
                %1099 = vst [vmem:[%s1095 + $0x8] sm:$0xff] %v1098
                %s1100 = sadd.s32 1, %s1093
                %p1101 = scmp.ge.s32.totalorder %s1100, %s1086
                %s1102 = scalar_select %p1101, 0, %s1100
                %s1103 = smul.u32 %s1102, 16
                %s1104 = smul.u32 %s1102, 16
                %s1105 = scalar_lea.vmem %s1066, %s1103 [#allocation2]
                %s1106 = scalar_lea.vmem %s1077, %s1104
              $region101: #{dynet_forward.1} parent=95 // loop_footer
                %s1090 = sadd.s32 %s1088, 1
              $region102: #{dynet_forward.1} parent=95 // loop_footer_branch
                %1087 = sbr.rel target = $region98
              $region103: #{dynet_forward.1} parent=95 // loop_exit
                _
              %s1107 = sshrl.u32 %s1073, 1
              %s1108 = sand.u32 %s1073, 1
              %s1109 = smul.u32 %s1107, 2
              %s1110 = smul.u32 8, %s1109
              %s1111 = scalar_lea.vmem %s1066, %s1110 [#allocation2]
              %s1112 = smul.u32 8, %s1109
              %s1113 = scalar_lea.vmem %s1077, %s1112
              // While loop
              $region104: #{dynet_forward.1} parent=95 // loop_pre_header
                _
              $region105: #{dynet_forward.1} parent=95 // loop_header
                %s1115 = sphi 0, %s1117
                %p1116 = scmp.ge.s32.totalorder %s1115, %s1108
                %s1120 = sphi 0, %s1127
                %s1121 = sphi %s1111, %s1130
                %s1122 = sphi %s1113, %s1131
              $region106: #{dynet_forward.1} parent=95 // loop_header_branch
                %1119 = sbr.rel (%p1116) target = $region110
              $region107: #{dynet_forward.1} parent=95 // loop_body
                %v1123 = vld [vmem:[%s1121] sm:$0xff]
                %1124 = vst [vmem:[%s1122] sm:$0xff] %v1123
                %s1125 = sadd.s32 1, %s1120
                %p1126 = scmp.ge.s32.totalorder %s1125, %s1108
                %s1127 = scalar_select %p1126, 0, %s1125
                %s1128 = smul.u32 %s1127, 8
                %s1129 = smul.u32 %s1127, 8
                %s1130 = scalar_lea.vmem %s1111, %s1128 [#allocation2]
                %s1131 = scalar_lea.vmem %s1113, %s1129
              $region108: #{dynet_forward.1} parent=95 // loop_footer
                %s1117 = sadd.s32 %s1115, 1
              $region109: #{dynet_forward.1} parent=95 // loop_footer_branch
                %1114 = sbr.rel target = $region105
              $region110: #{dynet_forward.1} parent=95 // loop_exit
                _
            $region96: #{dynet_forward.1} parent=87 // pred_fallthru
              _
          $region88: #{dynet_forward.1} parent=83 // pred_fallthru
            _
          %1182 = vnop
        $region84: #{dynet_forward.1} parent=79 // pred_fallthru
          _
      $region80: #{dynet_forward.1} parent=5 // pred_fallthru
        _
      %p1183 = scmp.le.s32.totalorder 2, %s21
      // Predicated region
      $region133: #{dynet_forward.1} parent=5 // pred_check
        %p1184 = pneg %p1183
      $region134: #{dynet_forward.1} parent=5 // pred_check_branch
        %1186 = sbr.rel (%p1184) target = $region136
      $region135: #{dynet_forward.1} parent=5 // pred_region
        %s1187 = ssub.s32 %s21, 2
        // Predicated region
        $region137: #{dynet_forward.1} parent=135 // pred_check
          %p1188 = pneg %p370
        $region138: #{dynet_forward.1} parent=135 // pred_check_branch
          %1190 = sbr.rel (%p1188) target = $region140
        $region139: #{dynet_forward.1} parent=135 // pred_region
          %s1191 = sand.u32 %s355, 1
          %s1192 = sand.u32 %s355, 1
          %s1193 = smul.addr %s1192, 16
          %s1194 = scalar_lea.vmem [#allocation2], %s1193
        $region140: #{dynet_forward.1} parent=135 // pred_fallthru
          _
      $region136: #{dynet_forward.1} parent=5 // pred_fallthru
        _
    $region6: #{dynet_forward.1} parent=1 // loop_footer
      %s25 = sadd.s32 1, %s21
    $region7: #{dynet_forward.1} parent=1 // loop_footer_branch
      %20 = sbr.rel target = $region3
    $region8: #{dynet_forward.1} parent=1 // loop_exit
      _

</llo_original>
